<compile_context>
chip_gen: v7x
topology: tpu7x:2x2x1
jax: 0.10.0
libtpu: 0.0.40
codegen_flags: <defaults>
</compile_context>

<pallas_src>
import jax
import jax.numpy as jnp
from jax.experimental import pallas as pl
from jax.experimental.pallas import tpu as pltpu


# ----------------------------------------------------------------------------
# Kernel
# ----------------------------------------------------------------------------
def gp_ip_kernel(scal_ref,            # SMEM (2,): [-0.5/(ls+0.01), 1 + noise]
                 xs_ref,              # (1, T)    query points on lanes
                 z_ref,               # (M, 1)    inducing points on sublanes
                 w_ref,               # (M+1, M)  [K_XX^-1 ; alpha^T] (resident)
                 out_ref):            # (2, T)    row 0 = mu, row 1 = var
    neg_inv_len = scal_ref[0]         # -0.5 / (ls + 0.01)
    var_off = scal_ref[1]             # 1.0 + noise  (diag(K_XsXs) == 1 here)

    xs = xs_ref[...]                                            # (1, T)
    z = z_ref[...]                                              # (M, 1)
    m = z_ref.shape[0]

    # K tile:  K[m, n] = exp(-(Z[m] - Xs[n])^2 * 0.5 / (ls + 0.01))
    k = jnp.exp(((z - xs) ** 2) * neg_inv_len)                  # (M, T)

    # One MXU matmul gives both quantities:
    #   rows 0..M-1 : K_XX^-1 @ K_XsX^T      (for the variance)
    #   row  M      : alpha^T @ K = mu^T     (alpha = K_XX^-1 y)
    a = jnp.dot(w_ref[...], k,
                preferred_element_type=jnp.float32)             # (M+1, T)

    mu = a[m:m + 1, :]                                          # (1, T)
    # diag(K_XsX K_XX^-1 K_XsX^T)[n] = sum_m a[m, n] * k[m, n]
    var = var_off - jnp.sum(a[:m, :] * k, axis=0, keepdims=True)  # (1, T)

    # Single (2, T) store -- avoids two masked single-sublane partial stores.
    out_ref[...] = jnp.concatenate([mu, var], axis=0)


# ----------------------------------------------------------------------------
# Host-side glue
# ----------------------------------------------------------------------------
def _round_up(x, m):
    return ((x + m - 1) // m) * m


def _choose_tiling(Ns):
    """Pick (tile, steps): wide lane tiles (<=4096), >=2 steps when possible
    so both v7x TensorCores are used; everything a multiple of 128 lanes."""
    ns128 = _round_up(max(Ns, 1), 128)
    if ns128 <= 128:
        steps = 1
    else:
        steps = max(2, -(-ns128 // 4096))          # ceil(ns128 / 4096)
    tile = _round_up(-(-Ns // steps), 128)         # ceil(Ns/steps) -> x128
    return tile, steps


def gp_ip_prepare(inducing_x_hat, inducing_y_hat, ls, noise):
    """Per-parameter precompute (hoisted out of forward): K_XX^-1, alpha, W.

    Returns (Z, W, scal) consumed by gp_ip_apply."""
    Z = jnp.asarray(inducing_x_hat, jnp.float32)                # (M, 1)
    y = jnp.asarray(inducing_y_hat, jnp.float32)                # (M, 1)
    assert Z.ndim == 2 and Z.shape[1] == 1, "GP_IP kernel assumes 1-D inputs"
    M = Z.shape[0]

    ls32 = jnp.asarray(ls, jnp.float32)
    noise32 = jnp.asarray(noise, jnp.float32)
    inv_len = 0.5 / (ls32 + 0.01)

    # K_XX, its inverse and alpha = K_XX^-1 @ y : tiny MxM, plain JAX glue.
    pd = (Z - Z.T) ** 2
    K_XX = jnp.exp(-pd * inv_len)
    K_XX_inv = jnp.linalg.inv(K_XX + 1e-6 * jnp.eye(M, dtype=jnp.float32))
    K_XX_inv = K_XX_inv.astype(jnp.float32)
    alpha = (K_XX_inv @ y).astype(jnp.float32)                  # (M, 1)

    # Fold alpha into the resident MXU operand: W = [K_XX^-1 ; alpha^T].
    W = jnp.concatenate([K_XX_inv, alpha.T], axis=0)            # (M+1, M)

    # Scalars packed once in SMEM: [-inv_len, 1 + noise].
    scal = jnp.stack([-inv_len, 1.0 + noise32]).astype(jnp.float32)
    return Z, W, scal


def gp_ip_apply(Xs, Z, W, scal):
    """Pallas forward given prepared (Z, W, scal)."""
    Xs = jnp.asarray(Xs, jnp.float32)
    assert Xs.ndim == 2 and Xs.shape[1] == 1, "GP_IP kernel assumes 1-D inputs"
    Ns = Xs.shape[0]
    M = Z.shape[0]
    Mp1 = W.shape[0]

    tile, steps = _choose_tiling(Ns)
    ns_pad = tile * steps

    # Lane-dense query row, zero-padded (padded lanes are sliced off below).
    xs_row = jnp.pad(Xs[:, 0], (0, ns_pad - Ns)).reshape(1, ns_pad)

    # VMEM budget: xs + out (double-buffered) + resident Z/W + k/A slack.
    vmem_est = 4 * (2 * tile + 4 * tile + 2 * (Mp1 * M + M) + 6 * Mp1 * tile)
    vmem_limit = int(min(64 << 20, max(4 * vmem_est, 16 << 20)))

    out = pl.pallas_call(
        gp_ip_kernel,
        out_shape=jax.ShapeDtypeStruct((2, ns_pad), jnp.float32),
        grid_spec=pltpu.PrefetchScalarGridSpec(
            num_scalar_prefetch=0,
            grid=(steps,),
            in_specs=[
                pl.BlockSpec(memory_space=pltpu.MemorySpace.SMEM),   # scalars
                pl.BlockSpec((1, tile), lambda i: (0, i)),           # xs row
                pl.BlockSpec((M, 1), lambda i: (0, 0)),              # Z (resident)
                pl.BlockSpec((Mp1, M), lambda i: (0, 0)),            # W (resident)
            ],
            out_specs=pl.BlockSpec((2, tile), lambda i: (0, i)),
        ),
        compiler_params=pltpu.CompilerParams(
            dimension_semantics=("parallel",),
            vmem_limit_bytes=vmem_limit),
    )(scal, xs_row, Z, W)

    mu = out[0, :Ns, None]                                      # (Ns, 1)
    var = out[1, :Ns, None]                                     # (Ns, 1)
    return mu, var


def gp_ip_forward(Xs, inducing_x_hat, inducing_y_hat, ls, noise):
    """Drop-in equivalent of GP_IP.forward(Xs) -> (mu, diag(sigma)[:, None])."""
    Z, W, scal = gp_ip_prepare(inducing_x_hat, inducing_y_hat, ls, noise)
    return gp_ip_apply(Xs, Z, W, scal)


# ----------------------------------------------------------------------------
# Pure-JAX reference mirroring the torch forward exactly
# ----------------------------------------------------------------------------
def gp_ip_forward_ref(Xs, inducing_x_hat, inducing_y_hat, ls, noise):
    def kmat(xi, xj):
        return jnp.exp(-((xi - xj.T) ** 2) * 0.5 / (ls + 0.01))
    K_XsX = kmat(Xs, inducing_x_hat)
    K_XX = kmat(inducing_x_hat, inducing_x_hat)
    K_XsXs = kmat(Xs, Xs)
    K_XX_inv = jnp.linalg.inv(K_XX + 1e-6 * jnp.eye(K_XX.shape[0]))
    mu = K_XsX @ K_XX_inv @ inducing_y_hat
    sigma = (K_XsXs - K_XsX @ K_XX_inv @ K_XsX.T
             + noise * jnp.eye(K_XsXs.shape[0]))
    return mu, jnp.diag(sigma)[:, None]


if __name__ == "__main__":
    key = jax.random.PRNGKey(0)
    k_noise, k_unif, k_xs = jax.random.split(key, 3)

    # Training data the module would be constructed with (only min/max matter
    # for inducing-point placement).
    num_ip = 8          # num_inducing_points
    dim = 1
    Ns = 16             # number of test/query points for forward()
    xs_train = jnp.linspace(-3.0, 3.0, 32, dtype=jnp.float32).reshape(-1, 1)

    # Deterministic parameter init mirroring __init__:
    inducing_x = jnp.linspace(xs_train.min(), xs_train.max(),
                              num_ip, dtype=jnp.float32).reshape(-1, 1)
    inducing_x_hat = inducing_x + jnp.clip(
        jax.random.normal(k_noise, inducing_x.shape, jnp.float32), -0.1, 0.1)
    inducing_y_hat = jax.random.uniform(
        k_unif, (num_ip, dim), jnp.float32, minval=-0.5, maxval=0.5)
    ls = jnp.float32(0.2)
    noise = jnp.float32(0.5)

    # Query points for forward()
    Xs = jax.random.uniform(k_xs, (Ns, 1), jnp.float32, minval=-3.0, maxval=3.0)

    mu, var = gp_ip_forward(Xs, inducing_x_hat, inducing_y_hat, ls, noise)
    jax.block_until_ready((mu, var))

    mu_ref, var_ref = gp_ip_forward_ref(Xs, inducing_x_hat, inducing_y_hat, ls, noise)
    assert mu.shape == (Ns, 1) and var.shape == (Ns, 1)
    assert jnp.allclose(mu, mu_ref, atol=1e-4, rtol=1e-4)
    assert jnp.allclose(var, var_ref, atol=1e-4, rtol=1e-4)

    # A second, larger query set exercises the multi-step (>=2 tiles) path.
    Xs_big = jax.random.uniform(jax.random.PRNGKey(1), (300, 1), jnp.float32,
                                minval=-3.0, maxval=3.0)
    mu_b, var_b = gp_ip_forward(Xs_big, inducing_x_hat, inducing_y_hat, ls, noise)
    jax.block_until_ready((mu_b, var_b))
    mu_br, var_br = gp_ip_forward_ref(Xs_big, inducing_x_hat, inducing_y_hat, ls, noise)
    assert jnp.allclose(mu_b, mu_br, atol=1e-4, rtol=1e-4)
    assert jnp.allclose(var_b, var_br, atol=1e-4, rtol=1e-4)

    print("KERNEL_OK")
</pallas_src>

<mosaic_0001>
module attributes {stable_mosaic.version = 11 : i64} {
  func.func @gp_ip_kernel(%arg0: i32, %arg1: memref<2xf32, #tpu.memory_space<smem>>, %arg2: memref<1x128xf32, #tpu.memory_space<vmem>>, %arg3: memref<8x1xf32, #tpu.memory_space<vmem>>, %arg4: memref<9x8xf32, #tpu.memory_space<vmem>>, %arg5: memref<2x128xf32, #tpu.memory_space<vmem>>) attributes {dimension_semantics = [#tpu.dimension_semantics<parallel>], iteration_bounds = array<i64: 1>, scalar_prefetch = 0 : i64, scratch_operands = 0 : i64, tpu.core_type = #tpu.core_type<tc>, window_params = [{transform_indices = @transform_0, window_bounds = array<i64: 2>}, {transform_indices = @transform_1, window_bounds = array<i64: 1, 128>}, {pipeline_mode = #tpu.pipeline_mode<synchronous>, transform_indices = @transform_2, window_bounds = array<i64: 8, 1>}, {pipeline_mode = #tpu.pipeline_mode<synchronous>, transform_indices = @transform_3, window_bounds = array<i64: 9, 8>}, {transform_indices = @transform_4, window_bounds = array<i64: 2, 128>}]} {
    %c0 = arith.constant 0 : index
    %0 = memref.load %arg1[%c0] : memref<2xf32, #tpu.memory_space<smem>>
    %c1 = arith.constant 1 : index
    %1 = memref.load %arg1[%c1] : memref<2xf32, #tpu.memory_space<smem>>
    %c0_0 = arith.constant 0 : index
    %c0_1 = arith.constant 0 : index
    %2 = vector.load %arg2[%c0_0, %c0_1] : memref<1x128xf32, #tpu.memory_space<vmem>>, vector<1x128xf32>
    %c0_2 = arith.constant 0 : index
    %c0_3 = arith.constant 0 : index
    %3 = vector.load %arg3[%c0_2, %c0_3] : memref<8x1xf32, #tpu.memory_space<vmem>>, vector<8x1xf32>
    %4 = vector.broadcast %3 : vector<8x1xf32> to vector<8x128xf32>
    %5 = vector.broadcast %2 : vector<1x128xf32> to vector<8x128xf32>
    %6 = arith.subf %4, %5 : vector<8x128xf32>
    %7 = arith.mulf %6, %6 : vector<8x128xf32>
    %8 = vector.broadcast %0 : f32 to vector<8x128xf32>
    %9 = arith.mulf %7, %8 : vector<8x128xf32>
    %10 = math.exp %9 : vector<8x128xf32>
    %c0_4 = arith.constant 0 : index
    %c0_5 = arith.constant 0 : index
    %11 = vector.load %arg4[%c0_4, %c0_5] : memref<9x8xf32, #tpu.memory_space<vmem>>, vector<9x8xf32>
    %cst = arith.constant dense<0.000000e+00> : vector<9x128xf32>
    %12 = tpu.matmul %11, %10, %cst {dimension_numbers = #tpu.dot_dimension_numbers<[1], [0], [0], [1], [0, 0, 1, 1], [], []>} : vector<9x8xf32>, vector<8x128xf32>, vector<9x128xf32> -> vector<9x128xf32>
    %13 = vector.extract_strided_slice %12 {offsets = [8, 0], sizes = [1, 128], strides = [1, 1]} : vector<9x128xf32> to vector<1x128xf32>
    %14 = vector.extract_strided_slice %12 {offsets = [0, 0], sizes = [8, 128], strides = [1, 1]} : vector<9x128xf32> to vector<8x128xf32>
    %15 = arith.mulf %14, %10 : vector<8x128xf32>
    %cst_6 = arith.constant dense<0.000000e+00> : vector<128xf32>
    %16 = vector.multi_reduction <add>, %15, %cst_6 [0] : vector<8x128xf32> to vector<128xf32>
    %17 = vector.shape_cast %16 : vector<128xf32> to vector<1x128xf32>
    %18 = vector.broadcast %1 : f32 to vector<1x128xf32>
    %19 = arith.subf %18, %17 : vector<1x128xf32>
    %20 = tpu.concatenate %13, %19 in 0 : vector<1x128xf32>, vector<1x128xf32> -> vector<2x128xf32>
    %c0_7 = arith.constant 0 : index
    %c0_8 = arith.constant 0 : index
    %21 = vector.load %arg5[%c0_7, %c0_8] : memref<2x128xf32, #tpu.memory_space<vmem>>, vector<2x128xf32>
    tpu.vector_store %arg5[%c0_7, %c0_8], %20 {strides = array<i32>} : memref<2x128xf32, #tpu.memory_space<vmem>>, vector<2x128xf32>,
    return
  }
  func.func @transform_0(%arg0: i32) -> i32 {
    %c0_i32 = arith.constant 0 : i32
    %c0_i32_0 = arith.constant 0 : i32
    return %c0_i32 : i32
  }
  func.func @transform_1(%arg0: i32) -> (i32, i32) {
    %c0_i32 = arith.constant 0 : i32
    %c0_i32_0 = arith.constant 0 : i32
    return %c0_i32, %arg0 : i32, i32
  }
  func.func @transform_2(%arg0: i32) -> (i32, i32) {
    %c0_i32 = arith.constant 0 : i32
    %c0_i32_0 = arith.constant 0 : i32
    %c0_i32_1 = arith.constant 0 : i32
    return %c0_i32, %c0_i32_0 : i32, i32
  }
  func.func @transform_3(%arg0: i32) -> (i32, i32) {
    %c0_i32 = arith.constant 0 : i32
    %c0_i32_0 = arith.constant 0 : i32
    %c0_i32_1 = arith.constant 0 : i32
    return %c0_i32, %c0_i32_0 : i32, i32
  }
  func.func @transform_4(%arg0: i32) -> (i32, i32) {
    %c0_i32 = arith.constant 0 : i32
    %c0_i32_0 = arith.constant 0 : i32
    return %c0_i32, %arg0 : i32, i32
  }
}

</mosaic_0001>

<llo_original>
// kernel: tpu_custom_call.1
$region0: #{tpu_custom_call.1}
  #allocation0 [shape = 'u32[]', space=smem, size = 0x4, offset = 0x4, fixed_abs, tag = 'smem constant byte address 0x4 - core index']
  #allocation1 [shape = 'u32[144,128]{1,0:T(1,128)}', space=vmem, size = 0x12000, scoped, tag = 'internal scratch']
  %s0 = inlined_call_operand.vmem [shape: f32[2], index: 0, kind: input, shape index: {}]
  %s1 = inlined_call_operand.vmem [shape: f32[1,128], index: 1, kind: input, shape index: {}]
  %s2 = inlined_call_operand.vmem [shape: f32[8,1], index: 2, kind: input, shape index: {}]
  %s3 = inlined_call_operand.vmem [shape: f32[9,8], index: 3, kind: input, shape index: {}]
  %s4 = inlined_call_operand.hbm [shape: f32[2,128], index: 4, kind: output, shape index: {}]
  %s5 = sld [smem:[#allocation0]]
  $region30: #{tpu_custom_call.1} parent=0
    _
  %s7 = ssub.s32 1, %s5
  %s8 = scalar_select 0, %s7, %s5
  $region1: #{tpu_custom_call.1} parent=0
    #allocation2 [shape = 'u8[512]{0}', space=smem, size = 0x200, scoped, tag = 'input window, operand 0, single buffered']
    #allocation3 [shape = 's32[1]{0}', space=sflag, size = 0x4, scoped, tag = 'scoped memory for tpu_custom_call.1']
    #allocation4 [shape = 's32[1]{0}', space=sflag, size = 0x4, scoped, tag = 'scoped memory for tpu_custom_call.1']
    #allocation5 [shape = 'u8[1024]{0}', space=vmem, size = 0x400, scoped, tag = 'output window, operand 0, single buffered']
    %9 = vsyncpa [#allocation4], 0
    %10 = vsyncpa [#allocation3], 0
    // Predicated region
    $region2: #{tpu_custom_call.1} parent=1 // pred_check
      _
    $region3: #{tpu_custom_call.1} parent=1 // pred_check_branch
      %12 = sbr.rel (0) target = $region5
    $region4: #{tpu_custom_call.1} parent=1 // pred_region
      %s14 = ssub.s32 16, 16
      %15 = vsyncadd [#allocation4], %s14
      %s17 = sshll.u32 %s0, 4
      %s18 = int_to_ptr.vmem [resolvable:$true] %s17
      %20 = dma.vmem_to_smem %s18, 16, [#allocation2], [#allocation4]
    $region5: #{tpu_custom_call.1} parent=1 // pred_fallthru
      _
    // Predicated region
    $region6: #{tpu_custom_call.1} parent=1 // pred_check
      _
    $region7: #{tpu_custom_call.1} parent=1 // pred_check_branch
      %22 = sbr.rel (0) target = $region9
    $region8: #{tpu_custom_call.1} parent=1 // pred_region
      _
    $region9: #{tpu_custom_call.1} parent=1 // pred_fallthru
      _
    // Predicated region
    $region10: #{tpu_custom_call.1} parent=1 // pred_check
      _
    $region11: #{tpu_custom_call.1} parent=1 // pred_check_branch
      %24 = sbr.rel (0) target = $region13
    $region12: #{tpu_custom_call.1} parent=1 // pred_region
      _
    $region13: #{tpu_custom_call.1} parent=1 // pred_fallthru
      _
    // Predicated region
    $region14: #{tpu_custom_call.1} parent=1 // pred_check
      _
    $region15: #{tpu_custom_call.1} parent=1 // pred_check_branch
      %26 = sbr.rel (0) target = $region17
    $region16: #{tpu_custom_call.1} parent=1 // pred_region
      _
    $region17: #{tpu_custom_call.1} parent=1 // pred_fallthru
      _
    // Predicated region
    $region18: #{tpu_custom_call.1} parent=1 // pred_check
      _
    $region19: #{tpu_custom_call.1} parent=1 // pred_check_branch
      %28 = sbr.rel (0) target = $region21
    $region20: #{tpu_custom_call.1} parent=1 // pred_region
      %29 = dma.done [#allocation4], 16
    $region21: #{tpu_custom_call.1} parent=1 // pred_fallthru
      _
    %30 = sfence
    %s31 = sld [smem:[#allocation2]]
    %s32 = sld [smem:[#allocation2 + $0x1]]
    %v33 = vld [vmem:[%s1] sm:$0x1]
    %v34 = vld [vmem:[%s2] sm:$0xff]
    %36 = vset.pattern.permute.xlu0 0
    %37 = vperm.xlu0 %36, %v34
    %v38 = vpop.permute.xlu0 %37
    %v41 = vlaneseq
    %v42 = vshrl.u32 %v41, 7
    %v43 = vsub.s32 0, %v42
    %v44 = vrot.slane %v33, %v43
    %v46 = vsub.f32 %v38, %v44
    %v47 = vmul.f32 %v46, %v46
    %v48 = vstv %s31
    %v49 = vmul.f32 %v47, %v48
    %v50 = vmul.f32 %v49, 1.442695
    %v51 = vpow.pop %v50
    %v52 = vld [vmem:[%s3] sm:$0xff]
    %v53 = vld [vmem:[%s3 + $0x8] sm:$0x1]
    %vm54 = vcmask 64512
    %v56 = vsel %vm54, %v52, 0
    %v59 = vsel %vm54, %v53, 0
    %61 = vmatprep.subr.mxu0 0.0
    %62 = vmatpush1.msra.mxu0 %v51
    %63 = vmatprep.subr.mxu0 0.0
    %64 = vmatpush1.msra.mxu0 0.0
    %65 = vmatprep.subr.mxu0 0.0
    %66 = vmatpush1.msra.mxu0 0.0
    %67 = vmatprep.subr.mxu0 0.0
    %68 = vmatpush1.msra.mxu0 0.0
    %69 = vmatprep.subr.mxu0 0.0
    %70 = vmatpush1.msra.mxu0 0.0
    %71 = vmatprep.subr.mxu0 0.0
    %72 = vmatpush1.msra.mxu0 0.0
    %73 = vmatprep.subr.mxu0 0.0
    %74 = vmatpush1.msra.mxu0 0.0
    %75 = vmatprep.subr.mxu0 0.0
    %76 = vmatpush1.msra.mxu0 0.0
    %77 = vmatprep.subr.mxu0 0.0
    %78 = vmatpush1.msra.mxu0 0.0
    %79 = vmatprep.subr.mxu0 0.0
    %80 = vmatpush1.msra.mxu0 0.0
    %81 = vmatprep.subr.mxu0 0.0
    %82 = vmatpush1.msra.mxu0 0.0
    %83 = vmatprep.subr.mxu0 0.0
    %84 = vmatpush1.msra.mxu0 0.0
    %85 = vmatprep.subr.mxu0 0.0
    %86 = vmatpush1.msra.mxu0 0.0
    %87 = vmatprep.subr.mxu0 0.0
    %88 = vmatpush1.msra.mxu0 0.0
    %89 = vmatprep.subr.mxu0 0.0
    %90 = vmatpush1.msra.mxu0 0.0
    %91 = vmatprep.subr.mxu0 0.0
    %92 = vmatpush1.msra.mxu0 0.0
    %93 = vmatprep.subr.mxu0 0.0
    %94 = vmatpush1.msra.mxu0 0.0
    %95 = vmatprep.subr.mxu0 0.0
    %96 = vmatpush1.msra.mxu0 0.0
    %97 = vmatprep.subr.mxu0 0.0
    %98 = vmatpush1.msra.mxu0 0.0
    %99 = vmatprep.subr.mxu0 0.0
    %100 = vmatpush1.msra.mxu0 0.0
    %101 = vmatprep.subr.mxu0 0.0
    %102 = vmatpush1.msra.mxu0 0.0
    %103 = vmatprep.subr.mxu0 0.0
    %104 = vmatpush1.msra.mxu0 0.0
    %105 = vmatprep.subr.mxu0 0.0
    %106 = vmatpush1.msra.mxu0 0.0
    %107 = vmatprep.subr.mxu0 0.0
    %108 = vmatpush1.msra.mxu0 0.0
    %109 = vmatprep.subr.mxu0 0.0
    %110 = vmatpush1.msra.mxu0 0.0
    %111 = vmatprep.subr.mxu0 0.0
    %112 = vmatpush1.msra.mxu0 0.0
    %113 = vmatprep.subr.mxu0 0.0
    %114 = vmatpush1.msra.mxu0 0.0
    %115 = vmatprep.subr.mxu0 0.0
    %116 = vmatpush1.msra.mxu0 0.0
    %117 = vmatprep.subr.mxu0 0.0
    %118 = vmatpush1.msra.mxu0 0.0
    %119 = vmatprep.subr.mxu0 0.0
    %120 = vmatpush1.msra.mxu0 0.0
    %121 = vmatprep.subr.mxu0 0.0
    %122 = vmatpush1.msra.mxu0 0.0
    %123 = vmatprep.subr.mxu0 0.0
    %124 = vmatpush1.msra.mxu0 0.0
    %125 = vmatprep.mubr.f32.mxu0 0.0
    %126 = vmatmul.mubr.f32.gmra.mrb[0].mxu0 %v56
    %v127 = vpop.f32.mrb[0].mxu0
    %v128 = vadd.f32 0.0, %v127
    %v129 = vpop.f32.mrb[0].mxu0
    %130 = vmatprep.mubr.f32.mxu0 0.0
    %131 = vmatmul.mubr.f32.gmra.mrb[0].mxu0 %v59
    %v132 = vpop.f32.mrb[0].mxu0
    %v133 = vadd.f32 0.0, %v132
    %v134 = vpop.f32.mrb[0].mxu0
    %135 = vdwg.mxu0
    %v136 = vmul.f32 %v128, %v51
    %v137 = vrot.slane %v136, 4
    %v138 = vadd.f32 %v136, %v137
    %v139 = vrot.slane %v138, 2
    %v140 = vadd.f32 %v138, %v139
    %v141 = vrot.slane %v140, 1
    %v142 = vadd.f32 %v140, %v141
    %v143 = vstv %s32
    %v144 = vsub.f32 %v143, %v142
    %vm145 = vcmask 1040384
    %v146 = vsel %vm145, %v133, %v144
    %147 = vst [vmem:[#allocation5] sm:$0x3] %v146
    // Predicated region
    $region22: #{tpu_custom_call.1} parent=1 // pred_check
      _
    $region23: #{tpu_custom_call.1} parent=1 // pred_check_branch
      %149 = sbr.rel (0) target = $region25
    $region24: #{tpu_custom_call.1} parent=1 // pred_region
      %s151 = ssub.s32 32, 32
      %152 = vsyncadd [#allocation3], %s151
      %s154 = sshll.u32 [#allocation5], 4
      %s155 = int_to_ptr.vmem [resolvable:$true] %s154
      %157 = dma.vmem_to_hbm [thread:$0]  %s155, 32, %s4, [#allocation3]
    $region25: #{tpu_custom_call.1} parent=1 // pred_fallthru
      _
    // Predicated region
    $region26: #{tpu_custom_call.1} parent=1 // pred_check
      _
    $region27: #{tpu_custom_call.1} parent=1 // pred_check_branch
      %159 = sbr.rel (0) target = $region29
    $region28: #{tpu_custom_call.1} parent=1 // pred_region
      %160 = dma.done [#allocation3], 32
    $region29: #{tpu_custom_call.1} parent=1 // pred_fallthru
      _
    %161 = vsyncpa [#allocation3], 1
    %162 = vsyncpa [#allocation4], 1

</llo_original>
